<compile_context>
chip_gen: v7x
topology: tpu7x:2x2x1
jax: 0.10.0
libtpu: 0.0.40
codegen_flags: <defaults>
</compile_context>

<pallas_src>
import functools

import numpy as np
import jax
import jax.numpy as jnp
from jax.experimental import pallas as pl
from jax.experimental.pallas import tpu as pltpu


def _round_up(v, m):
    return ((v + m - 1) // m) * m


def club_kernel(x_ref, y_ref, p_ref, out_ref, *, x_dim, H, D, L1, bias_row):
    H2 = 2 * H
    x = x_ref[...]                              # MXU operand, native dtype
    y = y_ref[...].astype(jnp.float32)          # elementwise tail stays f32
    B = y.shape[0]

    # Static, vreg-aligned views into the single packed parameter slab.
    w1 = p_ref[:x_dim, :H2]                     # [x_dim, 2H]   (lanes 0..)
    b1 = p_ref[bias_row:bias_row + 1, :H2]      # [1, 2H]       (own sublane row)
    w2 = p_ref[:H2, L1:]                        # [2H, 256]     (starts at lane 128)
    b2 = p_ref[bias_row:bias_row + 1, L1:]      # [1, 256]

    # Fused first layer of both branches (p_mu | p_logvar) + ReLU.
    h = jnp.maximum(
        jnp.dot(x, w1, preferred_element_type=jnp.float32) + b1, 0.0)

    # Fused block-diagonal second layer.  mu occupies lanes [0, D),
    # logvar occupies lanes [128, 128+D) -> both slices are whole-vreg views.
    z = jnp.dot(h, w2, preferred_element_type=jnp.float32) + b2   # [B, 256]
    mu = z[:, :D]                                                  # p_mu out
    logvar = jnp.tanh(z[:, 128:128 + D])                           # p_logvar out

    # 1 / (2 * exp(logvar)) as a multiply (EUP exp, no divide).
    half_inv_var = 0.5 * jnp.exp(-logvar)                          # [B, D]

    # Algebraic collapse of the [B,B,D] negative term (exact):
    #   mean_j (y[j,d]-mu[i,d])^2 - (mu[i,d]-y[i,d])^2
    #     = (mean_j y[j,d]^2 - y[i,d]^2) + 2*mu[i,d]*(y[i,d] - mean_j y[j,d])
    y_sq = y * y
    ysq_mean = jnp.mean(y_sq, axis=0, keepdims=True)               # [1, D]
    y_mean = jnp.mean(y, axis=0, keepdims=True)                    # [1, D]
    term = (ysq_mean - y_sq) + 2.0 * mu * (y - y_mean)             # [B, D]

    # (positive.sum(-1) - negative.sum(-1)).mean() as one fused reduction.
    mi_upper = jnp.sum(half_inv_var * term) * (1.0 / B)

    out_ref[0, 0] = mi_upper                                       # scalar -> SMEM


def club_forward(x, y, packed_params, meta):
    """Whole CLUB forward in one Pallas call (small shapes -> no tiling grid)."""
    kernel = functools.partial(club_kernel, **meta)
    out = pl.pallas_call(
        kernel,
        out_shape=jax.ShapeDtypeStruct((1, 1), jnp.float32),
        in_specs=[pl.BlockSpec(memory_space=pltpu.MemorySpace.VMEM)] * 3,
        out_specs=pl.BlockSpec(memory_space=pltpu.MemorySpace.SMEM),
    )(x, y, packed_params)
    return out[0, 0]


def pack_params(w_mu1, b_mu1, w_mu2, b_mu2, w_lv1, b_lv1, w_lv2, b_lv2):
    """Pack both branch MLPs into one lane/sublane-aligned parameter slab.

    Layout (rows x lanes), R = round_up(max(x_dim, 2H), 8), L1 = round_up(2H, 128):
      rows [0, x_dim), lanes [0, 2H)            : fused first-layer weight [w_mu1 | w_lv1]
      rows [0, H),    lanes [L1, L1+D)          : w_mu2
      rows [H, 2H),   lanes [L1+128, L1+128+D)  : w_lv2   (block-diagonal, lane-aligned)
      row  R,         lanes [0, 2H)             : fused first-layer bias
      row  R,         lanes [L1, ...)           : second-layer biases (mu tile | logvar tile)
    """
    x_dim, H = w_mu1.shape
    _, D = w_mu2.shape
    assert D <= 128, "packing assumes y_dim <= 128"
    H2 = 2 * H
    L1 = _round_up(H2, 128)
    R = _round_up(max(x_dim, H2), 8)
    dtype = w_mu1.dtype

    P = jnp.zeros((R + 8, L1 + 256), dtype)
    # First layer (both branches side by side on the lane axis).
    P = P.at[:x_dim, :H].set(w_mu1)
    P = P.at[:x_dim, H:H2].set(w_lv1)
    # Second layer, block-diagonal with a 128-lane-aligned mu/logvar split.
    P = P.at[:H, L1:L1 + D].set(w_mu2)
    P = P.at[H:H2, L1 + 128:L1 + 128 + D].set(w_lv2)
    # Biases on a dedicated sublane row.
    P = P.at[R, :H].set(b_mu1[0])
    P = P.at[R, H:H2].set(b_lv1[0])
    P = P.at[R, L1:L1 + D].set(b_mu2[0])
    P = P.at[R, L1 + 128:L1 + 128 + D].set(b_lv2[0])

    meta = dict(x_dim=x_dim, H=H, D=D, L1=L1, bias_row=R)
    return P, meta


def init_linear(key, fan_in, fan_out):
    """PyTorch nn.Linear default init (U(-1/sqrt(fan_in), 1/sqrt(fan_in)))."""
    kw, kb = jax.random.split(key)
    bound = 1.0 / np.sqrt(fan_in)
    w = jax.random.uniform(kw, (fan_in, fan_out), jnp.float32, -bound, bound)
    b = jax.random.uniform(kb, (1, fan_out), jnp.float32, -bound, bound)
    return w, b


def reference_forward(x, y, raw_params):
    """Pure-JAX literal replica of CLUB.forward (is_sampled_version=False)."""
    w_mu1, b_mu1, w_mu2, b_mu2, w_lv1, b_lv1, w_lv2, b_lv2 = raw_params
    mu = jnp.maximum(x @ w_mu1 + b_mu1, 0.0) @ w_mu2 + b_mu2
    logvar = jnp.tanh(jnp.maximum(x @ w_lv1 + b_lv1, 0.0) @ w_lv2 + b_lv2)
    var = jnp.exp(logvar)
    positive = -(mu - y) ** 2 / 2.0 / var
    negative = -jnp.mean((y[None, :, :] - mu[:, None, :]) ** 2, axis=1) / 2.0 / var
    return jnp.mean(positive.sum(-1) - negative.sum(-1))


# TODO(synk): the is_sampled_version=True branch (torch.randperm shuffle) is not
# implemented; only the default non-sampled CLUB forward is translated.


if __name__ == "__main__":
    # Small shapes consistent with the module: x [B, x_dim], y [B, y_dim]
    B, x_dim, y_dim, hidden_size = 8, 32, 16, 32
    H = hidden_size // 2

    key = jax.random.PRNGKey(0)
    kx, ky, k1, k2, k3, k4 = jax.random.split(key, 6)

    x = jax.random.normal(kx, (B, x_dim), jnp.float32)
    y = jax.random.normal(ky, (B, y_dim), jnp.float32)

    w_mu1, b_mu1 = init_linear(k1, x_dim, H)
    w_mu2, b_mu2 = init_linear(k2, H, y_dim)
    w_lv1, b_lv1 = init_linear(k3, x_dim, H)
    w_lv2, b_lv2 = init_linear(k4, H, y_dim)
    raw_params = (w_mu1, b_mu1, w_mu2, b_mu2, w_lv1, b_lv1, w_lv2, b_lv2)
    packed, meta = pack_params(*raw_params)

    out = jax.block_until_ready(club_forward(x, y, packed, meta))
    ref = jax.block_until_ready(reference_forward(x, y, raw_params))

    assert np.isfinite(float(out))
    np.testing.assert_allclose(float(out), float(ref), rtol=1e-4, atol=1e-4)
    print("KERNEL_OK")
</pallas_src>

<mosaic_0001>
module attributes {stable_mosaic.version = 11 : i64} {
  func.func @club_kernel(%arg0: memref<8x32xf32, #tpu.memory_space<vmem>>, %arg1: memref<8x16xf32, #tpu.memory_space<vmem>>, %arg2: memref<40x384xf32, #tpu.memory_space<vmem>>, %arg3: memref<1x1xf32, #tpu.memory_space<smem>>) attributes {dimension_semantics = [], scalar_prefetch = 0 : i64, scratch_operands = 0 : i64, tpu.core_type = #tpu.core_type<tc>} {
    %c0 = arith.constant 0 : index
    %c0_0 = arith.constant 0 : index
    %0 = vector.load %arg0[%c0, %c0_0] : memref<8x32xf32, #tpu.memory_space<vmem>>, vector<8x32xf32>
    %c0_1 = arith.constant 0 : index
    %c0_2 = arith.constant 0 : index
    %1 = vector.load %arg1[%c0_1, %c0_2] : memref<8x16xf32, #tpu.memory_space<vmem>>, vector<8x16xf32>
    %c0_3 = arith.constant 0 : index
    %c0_4 = arith.constant 0 : index
    %2 = vector.load %arg2[%c0_3, %c0_4] : memref<40x384xf32, #tpu.memory_space<vmem>>, vector<32x32xf32>
    %c32 = arith.constant 32 : index
    %c0_5 = arith.constant 0 : index
    %3 = vector.load %arg2[%c32, %c0_5] : memref<40x384xf32, #tpu.memory_space<vmem>>, vector<1x32xf32>
    %c0_6 = arith.constant 0 : index
    %c128 = arith.constant 128 : index
    %4 = vector.load %arg2[%c0_6, %c128] : memref<40x384xf32, #tpu.memory_space<vmem>>, vector<32x256xf32>
    %c32_7 = arith.constant 32 : index
    %c128_8 = arith.constant 128 : index
    %5 = vector.load %arg2[%c32_7, %c128_8] : memref<40x384xf32, #tpu.memory_space<vmem>>, vector<1x256xf32>
    %cst = arith.constant dense<0.000000e+00> : vector<8x32xf32>
    %6 = tpu.matmul %0, %2, %cst {dimension_numbers = #tpu.dot_dimension_numbers<[1], [0], [0], [1], [0, 0, 1, 1], [], []>} : vector<8x32xf32>, vector<32x32xf32>, vector<8x32xf32> -> vector<8x32xf32>
    %7 = vector.broadcast %3 : vector<1x32xf32> to vector<8x32xf32>
    %8 = arith.addf %6, %7 : vector<8x32xf32>
    %cst_9 = arith.constant 0.000000e+00 : f32
    %9 = vector.broadcast %cst_9 : f32 to vector<8x32xf32>
    %10 = arith.maximumf %8, %9 : vector<8x32xf32>
    %cst_10 = arith.constant dense<0.000000e+00> : vector<8x256xf32>
    %11 = tpu.matmul %10, %4, %cst_10 {dimension_numbers = #tpu.dot_dimension_numbers<[1], [0], [0], [1], [0, 0, 1, 1], [], []>} : vector<8x32xf32>, vector<32x256xf32>, vector<8x256xf32> -> vector<8x256xf32>
    %12 = vector.broadcast %5 : vector<1x256xf32> to vector<8x256xf32>
    %13 = arith.addf %11, %12 : vector<8x256xf32>
    %14 = vector.extract_strided_slice %13 {offsets = [0, 0], sizes = [8, 16], strides = [1, 1]} : vector<8x256xf32> to vector<8x16xf32>
    %15 = vector.extract_strided_slice %13 {offsets = [0, 128], sizes = [8, 16], strides = [1, 1]} : vector<8x256xf32> to vector<8x16xf32>
    %16 = math.tanh %15 : vector<8x16xf32>
    %cst_11 = arith.constant 0.000000e+00 : f32
    %17 = vector.broadcast %cst_11 : f32 to vector<8x16xf32>
    %18 = arith.subf %17, %16 : vector<8x16xf32>
    %19 = math.exp %18 : vector<8x16xf32>
    %cst_12 = arith.constant 5.000000e-01 : f32
    %20 = vector.broadcast %cst_12 : f32 to vector<8x16xf32>
    %21 = arith.mulf %20, %19 : vector<8x16xf32>
    %22 = arith.mulf %1, %1 : vector<8x16xf32>
    %cst_13 = arith.constant dense<0.000000e+00> : vector<16xf32>
    %23 = vector.multi_reduction <add>, %22, %cst_13 [0] : vector<8x16xf32> to vector<16xf32>
    %24 = vector.shape_cast %23 : vector<16xf32> to vector<1x16xf32>
    %cst_14 = arith.constant 8.000000e+00 : f32
    %25 = vector.broadcast %cst_14 : f32 to vector<1x16xf32>
    %26 = arith.divf %24, %25 : vector<1x16xf32>
    %cst_15 = arith.constant dense<0.000000e+00> : vector<16xf32>
    %27 = vector.multi_reduction <add>, %1, %cst_15 [0] : vector<8x16xf32> to vector<16xf32>
    %28 = vector.shape_cast %27 : vector<16xf32> to vector<1x16xf32>
    %cst_16 = arith.constant 8.000000e+00 : f32
    %29 = vector.broadcast %cst_16 : f32 to vector<1x16xf32>
    %30 = arith.divf %28, %29 : vector<1x16xf32>
    %31 = vector.broadcast %26 : vector<1x16xf32> to vector<8x16xf32>
    %32 = arith.subf %31, %22 : vector<8x16xf32>
    %cst_17 = arith.constant 2.000000e+00 : f32
    %33 = vector.broadcast %cst_17 : f32 to vector<8x16xf32>
    %34 = arith.mulf %33, %14 : vector<8x16xf32>
    %35 = vector.broadcast %30 : vector<1x16xf32> to vector<8x16xf32>
    %36 = arith.subf %1, %35 : vector<8x16xf32>
    %37 = arith.mulf %34, %36 : vector<8x16xf32>
    %38 = arith.addf %32, %37 : vector<8x16xf32>
    %39 = arith.mulf %21, %38 : vector<8x16xf32>
    %40 = vector.shape_cast %39 : vector<8x16xf32> to vector<1x8x16xf32>
    %cst_18 = arith.constant dense<0.000000e+00> : vector<1xf32>
    %41 = vector.multi_reduction <add>, %40, %cst_18 [1, 2] : vector<1x8x16xf32> to vector<1xf32>
    %42 = vector.shape_cast %41 : vector<1xf32> to vector<1x1x1xf32>
    %43 = vector.extract %42[0, 0, 0] : f32 from vector<1x1x1xf32>
    %cst_19 = arith.constant 1.250000e-01 : f32
    %44 = arith.mulf %43, %cst_19 : f32
    %c0_20 = arith.constant 0 : index
    %c0_21 = arith.constant 0 : index
    %45 = memref.load %arg3[%c0_20, %c0_21] : memref<1x1xf32, #tpu.memory_space<smem>>
    memref.store %44, %arg3[%c0_20, %c0_21] : memref<1x1xf32, #tpu.memory_space<smem>>
    return
  }
}

</mosaic_0001>

<llo_original>
// kernel: tpu_custom_call.1
$region0: #{tpu_custom_call.1}
  #allocation0 [shape = 'u32[]', space=smem, size = 0x4, offset = 0x4, fixed_abs, tag = 'smem constant byte address 0x4 - core index']
  #allocation1 [shape = 'u32[144,128]{1,0:T(1,128)}', space=vmem, size = 0x12000, scoped, tag = 'internal scratch']
  %s0 = inlined_call_operand.hbm [shape: f32[8,32], index: 0, kind: input, shape index: {}]
  %s1 = inlined_call_operand.hbm [shape: f32[8,16], index: 1, kind: input, shape index: {}]
  %s2 = inlined_call_operand.hbm [shape: f32[40,384], index: 2, kind: input, shape index: {}]
  %s3 = inlined_call_operand.hbm [shape: f32[1,1], index: 3, kind: output, shape index: {}]
  %s4 = sld [smem:[#allocation0]]
  $region34: #{tpu_custom_call.1} parent=0
    _
  %s6 = ssub.s32 1, %s4
  %s7 = scalar_select 0, %s6, %s4
  $region1: #{tpu_custom_call.1} parent=0
    #allocation2 [shape = 'u8[4096]{0}', space=vmem, size = 0x1000, scoped, tag = 'input window, operand 0, single buffered']
    #allocation3 [shape = 's32[1]{0}', space=sflag, size = 0x4, scoped, tag = 'scoped memory for tpu_custom_call.1']
    #allocation4 [shape = 's32[1]{0}', space=sflag, size = 0x4, scoped, tag = 'scoped memory for tpu_custom_call.1']
    #allocation5 [shape = 'u8[4096]{0}', space=vmem, size = 0x1000, scoped, tag = 'input window, operand 1, single buffered']
    #allocation6 [shape = 's32[1]{0}', space=sflag, size = 0x4, scoped, tag = 'scoped memory for tpu_custom_call.1']
    #allocation7 [shape = 'u8[61440]{0}', space=vmem, size = 0xf000, scoped, tag = 'input window, operand 2, single buffered']
    #allocation8 [shape = 'u8[512]{0}', space=smem, size = 0x200, scoped, tag = 'output window, operand 0, single buffered']
    %8 = vsyncpa [#allocation3], 0
    %9 = vsyncpa [#allocation6], 0
    %10 = vsyncpa [#allocation4], 0
    // Predicated region
    $region2: #{tpu_custom_call.1} parent=1 // pred_check
      _
    $region3: #{tpu_custom_call.1} parent=1 // pred_check_branch
      %12 = sbr.rel (0) target = $region5
    $region4: #{tpu_custom_call.1} parent=1 // pred_region
      %s14 = ssub.s32 128, 128
      %15 = vsyncadd [#allocation3], %s14
      %s17 = sshll.u32 [#allocation2], 4
      %s18 = int_to_ptr.vmem [resolvable:$true] %s17
      %20 = dma.hbm_to_vmem [thread:$0]  %s0, 128, %s18, [#allocation3]
    $region5: #{tpu_custom_call.1} parent=1 // pred_fallthru
      _
    // Predicated region
    $region6: #{tpu_custom_call.1} parent=1 // pred_check
      _
    $region7: #{tpu_custom_call.1} parent=1 // pred_check_branch
      %22 = sbr.rel (0) target = $region9
    $region8: #{tpu_custom_call.1} parent=1 // pred_region
      %s24 = ssub.s32 128, 128
      %25 = vsyncadd [#allocation6], %s24
      %s27 = sshll.u32 [#allocation5], 4
      %s28 = int_to_ptr.vmem [resolvable:$true] %s27
      %30 = dma.hbm_to_vmem [thread:$0]  %s1, 128, %s28, [#allocation6]
    $region9: #{tpu_custom_call.1} parent=1 // pred_fallthru
      _
    // Predicated region
    $region10: #{tpu_custom_call.1} parent=1 // pred_check
      _
    $region11: #{tpu_custom_call.1} parent=1 // pred_check_branch
      %32 = sbr.rel (0) target = $region13
    $region12: #{tpu_custom_call.1} parent=1 // pred_region
      %s34 = ssub.s32 1920, 1920
      %35 = vsyncadd [#allocation6], %s34
      %s36 = sshll.u32 [#allocation7], 4
      %s37 = int_to_ptr.vmem [resolvable:$true] %s36
      %42 = dma.hbm_to_vmem [thread:$0]  %s2, 1920, %s37, [#allocation6], 384, 384, 24
    $region13: #{tpu_custom_call.1} parent=1 // pred_fallthru
      _
    // Predicated region
    $region14: #{tpu_custom_call.1} parent=1 // pred_check
      _
    $region15: #{tpu_custom_call.1} parent=1 // pred_check_branch
      %44 = sbr.rel (0) target = $region17
    $region16: #{tpu_custom_call.1} parent=1 // pred_region
      %45 = dma.done [#allocation3], 128
    $region17: #{tpu_custom_call.1} parent=1 // pred_fallthru
      _
    // Predicated region
    $region18: #{tpu_custom_call.1} parent=1 // pred_check
      _
    $region19: #{tpu_custom_call.1} parent=1 // pred_check_branch
      %47 = sbr.rel (0) target = $region21
    $region20: #{tpu_custom_call.1} parent=1 // pred_region
      %48 = dma.done [#allocation6], 128
    $region21: #{tpu_custom_call.1} parent=1 // pred_fallthru
      _
    // Predicated region
    $region22: #{tpu_custom_call.1} parent=1 // pred_check
      _
    $region23: #{tpu_custom_call.1} parent=1 // pred_check_branch
      %50 = sbr.rel (0) target = $region25
    $region24: #{tpu_custom_call.1} parent=1 // pred_region
      %51 = dma.done [#allocation6], 1920
    $region25: #{tpu_custom_call.1} parent=1 // pred_fallthru
      _
    %v52 = vld [vmem:[#allocation2] sm:$0xff]
    %v53 = vld [vmem:[#allocation5] sm:$0xff]
    %v54 = vld [vmem:[#allocation7] sm:$0xff]
    %v55 = vld [vmem:[#allocation7 + $0x18] sm:$0xff]
    %v56 = vld [vmem:[#allocation7 + $0x30] sm:$0xff]
    %v57 = vld [vmem:[#allocation7 + $0x48] sm:$0xff]
    %v58 = vld [vmem:[#allocation7 + $0x60] ss:$0 sm:$0xff]
    %v59 = vld [vmem:[#allocation7 + $0x8] sm:$0xff]
    %v60 = vld [vmem:[#allocation7 + $0x10] sm:$0xff]
    %v61 = vld [vmem:[#allocation7 + $0x20] sm:$0xff]
    %v62 = vld [vmem:[#allocation7 + $0x28] sm:$0xff]
    %v63 = vld [vmem:[#allocation7 + $0x38] sm:$0xff]
    %v64 = vld [vmem:[#allocation7 + $0x40] sm:$0xff]
    %v65 = vld [vmem:[#allocation7 + $0x50] sm:$0xff]
    %v66 = vld [vmem:[#allocation7 + $0x58] sm:$0xff]
    %s67 = scalar_lea.vmem [#allocation7], 104
    %v68 = vld [vmem:[%s67] ss:$8 sm:$0x3]
    %vm69 = vcmask 261120
    %v71 = vsel %vm69, %v52, 0
    %73 = vmatprep.subr.mxu0 0.0
    %74 = vmatpush1.msra.mxu0 %v54
    %75 = vmatprep.subr.mxu0 0.0
    %76 = vmatpush1.msra.mxu0 %v55
    %77 = vmatprep.subr.mxu0 0.0
    %78 = vmatpush1.msra.mxu0 %v56
    %79 = vmatprep.subr.mxu0 0.0
    %80 = vmatpush1.msra.mxu0 %v57
    %81 = vmatprep.subr.mxu0 0.0
    %82 = vmatpush1.msra.mxu0 0.0
    %83 = vmatprep.subr.mxu0 0.0
    %84 = vmatpush1.msra.mxu0 0.0
    %85 = vmatprep.subr.mxu0 0.0
    %86 = vmatpush1.msra.mxu0 0.0
    %87 = vmatprep.subr.mxu0 0.0
    %88 = vmatpush1.msra.mxu0 0.0
    %89 = vmatprep.subr.mxu0 0.0
    %90 = vmatpush1.msra.mxu0 0.0
    %91 = vmatprep.subr.mxu0 0.0
    %92 = vmatpush1.msra.mxu0 0.0
    %93 = vmatprep.subr.mxu0 0.0
    %94 = vmatpush1.msra.mxu0 0.0
    %95 = vmatprep.subr.mxu0 0.0
    %96 = vmatpush1.msra.mxu0 0.0
    %97 = vmatprep.subr.mxu0 0.0
    %98 = vmatpush1.msra.mxu0 0.0
    %99 = vmatprep.subr.mxu0 0.0
    %100 = vmatpush1.msra.mxu0 0.0
    %101 = vmatprep.subr.mxu0 0.0
    %102 = vmatpush1.msra.mxu0 0.0
    %103 = vmatprep.subr.mxu0 0.0
    %104 = vmatpush1.msra.mxu0 0.0
    %105 = vmatprep.subr.mxu0 0.0
    %106 = vmatpush1.msra.mxu0 0.0
    %107 = vmatprep.subr.mxu0 0.0
    %108 = vmatpush1.msra.mxu0 0.0
    %109 = vmatprep.subr.mxu0 0.0
    %110 = vmatpush1.msra.mxu0 0.0
    %111 = vmatprep.subr.mxu0 0.0
    %112 = vmatpush1.msra.mxu0 0.0
    %113 = vmatprep.subr.mxu0 0.0
    %114 = vmatpush1.msra.mxu0 0.0
    %115 = vmatprep.subr.mxu0 0.0
    %116 = vmatpush1.msra.mxu0 0.0
    %117 = vmatprep.subr.mxu0 0.0
    %118 = vmatpush1.msra.mxu0 0.0
    %119 = vmatprep.subr.mxu0 0.0
    %120 = vmatpush1.msra.mxu0 0.0
    %121 = vmatprep.subr.mxu0 0.0
    %122 = vmatpush1.msra.mxu0 0.0
    %123 = vmatprep.subr.mxu0 0.0
    %124 = vmatpush1.msra.mxu0 0.0
    %125 = vmatprep.subr.mxu0 0.0
    %126 = vmatpush1.msra.mxu0 0.0
    %127 = vmatprep.subr.mxu0 0.0
    %128 = vmatpush1.msra.mxu0 0.0
    %129 = vmatprep.subr.mxu0 0.0
    %130 = vmatpush1.msra.mxu0 0.0
    %131 = vmatprep.subr.mxu0 0.0
    %132 = vmatpush1.msra.mxu0 0.0
    %133 = vmatprep.subr.mxu0 0.0
    %134 = vmatpush1.msra.mxu0 0.0
    %135 = vmatprep.subr.mxu0 0.0
    %136 = vmatpush1.msra.mxu0 0.0
    %137 = vmatprep.mubr.f32.mxu0 0.0
    %138 = vmatmul.mubr.f32.gmra.mrb[0].mxu0 %v71
    %v139 = vpop.f32.mrb[0].mxu0
    %v140 = vadd.f32 %v58, %v139
    %v141 = vpop.f32.mrb[0].mxu0
    %142 = vdwg.mxu0
    %v143 = vmax.f32 %v140, 0.0
    %v145 = vlaneseq
    %v146 = vshrl.u32 %v145, 7
    %v147 = vsub.s32 0, %v146
    %v148 = vrot.slane %v68, %v147
    %v149 = vlaneseq
    %v150 = vshrl.u32 %v149, 7
    %v151 = vsub.s32 1, %v150
    %v152 = vrot.slane %v68, %v151
    %v156 = vsel %vm69, %v143, 0
    %158 = vmatprep.subr.mxu0 %v60
    %159 = vmatpush1.msra.mxu0 %v59
    %160 = vmatprep.subr.mxu0 %v62
    %161 = vmatpush1.msra.mxu0 %v61
    %162 = vmatprep.subr.mxu0 %v64
    %163 = vmatpush1.msra.mxu0 %v63
    %164 = vmatprep.subr.mxu0 %v66
    %165 = vmatpush1.msra.mxu0 %v65
    %166 = vmatprep.subr.mxu0 0.0
    %167 = vmatpush1.msra.mxu0 0.0
    %168 = vmatprep.subr.mxu0 0.0
    %169 = vmatpush1.msra.mxu0 0.0
    %170 = vmatprep.subr.mxu0 0.0
    %171 = vmatpush1.msra.mxu0 0.0
    %172 = vmatprep.subr.mxu0 0.0
    %173 = vmatpush1.msra.mxu0 0.0
    %174 = vmatprep.subr.mxu0 0.0
    %175 = vmatpush1.msra.mxu0 0.0
    %176 = vmatprep.subr.mxu0 0.0
    %177 = vmatpush1.msra.mxu0 0.0
    %178 = vmatprep.subr.mxu0 0.0
    %179 = vmatpush1.msra.mxu0 0.0
    %180 = vmatprep.subr.mxu0 0.0
    %181 = vmatpush1.msra.mxu0 0.0
    %182 = vmatprep.subr.mxu0 0.0
    %183 = vmatpush1.msra.mxu0 0.0
    %184 = vmatprep.subr.mxu0 0.0
    %185 = vmatpush1.msra.mxu0 0.0
    %186 = vmatprep.subr.mxu0 0.0
    %187 = vmatpush1.msra.mxu0 0.0
    %188 = vmatprep.subr.mxu0 0.0
    %189 = vmatpush1.msra.mxu0 0.0
    %190 = vmatprep.subr.mxu0 0.0
    %191 = vmatpush1.msra.mxu0 0.0
    %192 = vmatprep.subr.mxu0 0.0
    %193 = vmatpush1.msra.mxu0 0.0
    %194 = vmatprep.subr.mxu0 0.0
    %195 = vmatpush1.msra.mxu0 0.0
    %196 = vmatprep.subr.mxu0 0.0
    %197 = vmatpush1.msra.mxu0 0.0
    %198 = vmatprep.subr.mxu0 0.0
    %199 = vmatpush1.msra.mxu0 0.0
    %200 = vmatprep.subr.mxu0 0.0
    %201 = vmatpush1.msra.mxu0 0.0
    %202 = vmatprep.subr.mxu0 0.0
    %203 = vmatpush1.msra.mxu0 0.0
    %204 = vmatprep.subr.mxu0 0.0
    %205 = vmatpush1.msra.mxu0 0.0
    %206 = vmatprep.subr.mxu0 0.0
    %207 = vmatpush1.msra.mxu0 0.0
    %208 = vmatprep.subr.mxu0 0.0
    %209 = vmatpush1.msra.mxu0 0.0
    %210 = vmatprep.subr.mxu0 0.0
    %211 = vmatpush1.msra.mxu0 0.0
    %212 = vmatprep.subr.mxu0 0.0
    %213 = vmatpush1.msra.mxu0 0.0
    %214 = vmatprep.subr.mxu0 0.0
    %215 = vmatpush1.msra.mxu0 0.0
    %216 = vmatprep.subr.mxu0 0.0
    %217 = vmatpush1.msra.mxu0 0.0
    %218 = vmatprep.subr.mxu0 0.0
    %219 = vmatpush1.msra.mxu0 0.0
    %220 = vmatprep.subr.mxu0 0.0
    %221 = vmatpush1.msra.mxu0 0.0
    %222 = vmatprep.mubr.f32.mxu0 0.0
    %223 = vmatmul.mubr.f32.gmra.mrb[0].mxu0 %v156
    %v224 = vpop.f32.mrb[0].mxu0
    %v225 = vadd.f32 %v148, %v224
    %v226 = vpop.f32.mrb[0].mxu0
    %v227 = vadd.f32 %v152, %v226
    %228 = vdwg.mxu0
    %v229 = vtanh.pop %v227
    %v230 = vsub.f32 0.0, %v229
    %v231 = vmul.f32 %v230, 1.442695
    %v232 = vpow.pop %v231
    %v233 = vmul.f32 %v232, 0.5
    %v234 = vmul.f32 %v53, %v53
    %vm235 = vcmask 130048
    %v236 = vsel %vm235, %v234, 0.0
    %v237 = vrot.slane %v236, 4
    %v238 = vadd.f32 %v236, %v237
    %v239 = vrot.slane %v238, 2
    %v240 = vadd.f32 %v238, %v239
    %v241 = vrot.slane %v240, 1
    %v242 = vadd.f32 %v240, %v241
    %v243 = vrcp.pop 8.0
    %v244 = vmul.f32 %v242, %v243
    %v245 = vsel %vm235, %v53, 0.0
    %v246 = vrot.slane %v245, 4
    %v247 = vadd.f32 %v245, %v246
    %v248 = vrot.slane %v247, 2
    %v249 = vadd.f32 %v247, %v248
    %v250 = vrot.slane %v249, 1
    %v251 = vadd.f32 %v249, %v250
    %v252 = vmul.f32 %v251, %v243
    %v253 = vsub.f32 %v244, %v234
    %v254 = vmul.f32 %v225, 2.0
    %v255 = vsub.f32 %v53, %v252
    %v256 = vmul.f32 %v254, %v255
    %v257 = vadd.f32 %v253, %v256
    %v258 = vmul.f32 %v233, %v257
    %v259 = vsel %vm235, %v258, 0.0
    %260 = vadd.xlane.f32.xlu0 %v259
    %v261 = vpop.xlane.xlu0 %260
    %v262 = vrot.slane %v261, 4
    %v263 = vadd.f32 %v261, %v262
    %v264 = vrot.slane %v263, 2
    %v265 = vadd.f32 %v263, %v264
    %v266 = vrot.slane %v265, 1
    %v267 = vadd.f32 %v265, %v266
    %s268 = vtos %v267
    %s269 = smul.f32 %s268, 0.125
    %s270 = scalar_lea.smem [#allocation8], 0
    %271 = sst [smem:[%s270]] %s269
    // Predicated region
    $region26: #{tpu_custom_call.1} parent=1 // pred_check
      _
    $region27: #{tpu_custom_call.1} parent=1 // pred_check_branch
      %273 = sbr.rel (0) target = $region29
    $region28: #{tpu_custom_call.1} parent=1 // pred_region
      %s275 = ssub.s32 16, 16
      %276 = vsyncadd [#allocation4], %s275
      %279 = dma.smem_to_hbm [#allocation8], 16, %s3, [#allocation4]
    $region29: #{tpu_custom_call.1} parent=1 // pred_fallthru
      _
    // Predicated region
    $region30: #{tpu_custom_call.1} parent=1 // pred_check
      _
    $region31: #{tpu_custom_call.1} parent=1 // pred_check_branch
      %281 = sbr.rel (0) target = $region33
    $region32: #{tpu_custom_call.1} parent=1 // pred_region
      %282 = dma.done [#allocation4], 16
    $region33: #{tpu_custom_call.1} parent=1 // pred_fallthru
      _
    %283 = sfence
    %284 = vsyncpa [#allocation3], 1
    %285 = vsyncpa [#allocation6], 1
    %286 = vsyncpa [#allocation4], 1

</llo_original>
